<compile_context>
chip_gen: v5e
topology: v5e:2x2
jax: 0.10.0
libtpu: 0.0.40
codegen_flags: <defaults>
</compile_context>

<pallas_src>
import jax
import jax.numpy as jnp
from jax import lax
from jax.experimental import pallas as pl
from jax.experimental.pallas import tpu as pltpu

# Hyperparameters implied by the module's __init__ (kept small).
N_EMBD = 32
BLOCK_SIZE = 8   # max sequence length (tril buffer size)
HEAD_SIZE = 16
DROPOUT = 0.0    # eval-mode dropout == identity
# TODO(synk): training-mode dropout on the attention weights is not applied
# (would need pltpu.prng_seed/prng_random_bits); eval semantics are exact.


def head_kernel(x_ref, wq_ref, wk_ref, wv_ref, o_ref):
    """x_ref: (B*T, C); wq_ref is pre-scaled by H**-0.5; o_ref: (B, T, H)."""
    B, T, H = o_ref.shape
    x = x_ref[...]                                            # (B*T, C) f32

    # Three separate projections on the MXU (no fused-QKV lane slicing).
    q = jnp.dot(x, wq_ref[...], preferred_element_type=jnp.float32)  # scaled
    k = jnp.dot(x, wk_ref[...], preferred_element_type=jnp.float32)
    v = jnp.dot(x, wv_ref[...], preferred_element_type=jnp.float32)

    # (B*T, H) -> (B, T, H): lane dim unchanged, sublane split on an 8-row
    # (tile-aligned) boundary -> pure relabeling, no data movement.
    q = q.reshape(B, T, H)
    k = k.reshape(B, T, H)
    v = v.reshape(B, T, H)

    # Batched q @ k^T, contracting on H directly (no transpose, no Python
    # unroll over B -> bounded vreg live ranges when B grows).
    wei = jnp.einsum('btd,bsd->bts', q, k,
                     preferred_element_type=jnp.float32)      # (B, T, T)

    # Causal mask built once; finite -1e30 so fully-masked rows can't NaN.
    row = lax.broadcasted_iota(jnp.int32, (T, T), 0)
    col = lax.broadcasted_iota(jnp.int32, (T, T), 1)
    causal = row >= col
    wei = jnp.where(causal[None, :, :], wei, jnp.float32(-1e30))

    # Numerically stable softmax; exact divide (tiny denominator vector).
    wei = wei - jnp.max(wei, axis=-1, keepdims=True)
    wei = jnp.exp(wei)
    wei = wei / jnp.sum(wei, axis=-1, keepdims=True)

    out = jnp.einsum('bts,bsd->btd', wei, v,
                     preferred_element_type=jnp.float32)      # (B, T, H)
    o_ref[...] = out.astype(o_ref.dtype)


def fold_attention_scale(wq, head_size=None):
    """Fold the H**-0.5 attention scale into Wq ONCE at parameter-init time."""
    h = wq.shape[1] if head_size is None else head_size
    return wq * (float(h) ** -0.5)


def head_forward(x, wq_scaled, wk, wv):
    """x: (B,T,C) f32; wq_scaled: (C,H) pre-scaled by H**-0.5; wk/wv: (C,H)."""
    B, T, C = x.shape
    H = wk.shape[1]
    x2d = x.reshape(B * T, C)   # free metadata reshape: batch folded into rows

    flops = 2 * (3 * B * T * C * H + 2 * B * T * T * H) + 5 * B * T * T
    bytes_accessed = 4 * (B * T * C + 3 * C * H + B * T * H)

    return pl.pallas_call(
        head_kernel,
        out_shape=jax.ShapeDtypeStruct((B, T, H), x.dtype),
        in_specs=[pl.BlockSpec(memory_space=pltpu.MemorySpace.VMEM)] * 4,
        out_specs=pl.BlockSpec(memory_space=pltpu.MemorySpace.VMEM),
        cost_estimate=pl.CostEstimate(
            flops=flops, transcendentals=B * T * T,
            bytes_accessed=bytes_accessed),
    )(x2d, wq_scaled, wk, wv)


def head_reference(x, wk, wq, wv):
    """Pure-JAX reference (unscaled wq), matmuls at HIGHEST precision."""
    hp = lax.Precision.HIGHEST
    k = jnp.einsum('btc,ch->bth', x, wk, precision=hp)
    q = jnp.einsum('btc,ch->bth', x, wq, precision=hp)
    v = jnp.einsum('btc,ch->bth', x, wv, precision=hp)
    T = x.shape[1]
    wei = jnp.einsum('btd,bsd->bts', q, k, precision=hp) * (k.shape[-1] ** -0.5)
    tril = jnp.tril(jnp.ones((T, T)))
    wei = jnp.where(tril == 0, -jnp.inf, wei)
    wei = jax.nn.softmax(wei, axis=-1)
    return jnp.einsum('bts,bsd->btd', wei, v, precision=hp)


if __name__ == "__main__":
    key = jax.random.PRNGKey(0)
    kx, kk, kq, kv = jax.random.split(key, 4)

    B, T = 2, BLOCK_SIZE
    x = jax.random.normal(kx, (B, T, N_EMBD), dtype=jnp.float32)
    # nn.Linear default init scale ~ U(-1/sqrt(C), 1/sqrt(C)); deterministic here.
    bound = 1.0 / (N_EMBD ** 0.5)
    wk = jax.random.uniform(kk, (N_EMBD, HEAD_SIZE), jnp.float32, -bound, bound)
    wq = jax.random.uniform(kq, (N_EMBD, HEAD_SIZE), jnp.float32, -bound, bound)
    wv = jax.random.uniform(kv, (N_EMBD, HEAD_SIZE), jnp.float32, -bound, bound)

    # Parameter-init-time preprocessing (NOT in the per-call path).
    wq_scaled = fold_attention_scale(wq, HEAD_SIZE)

    out = head_forward(x, wq_scaled, wk, wv)
    out = jax.block_until_ready(out)

    ref = head_reference(x, wk, wq, wv)
    assert out.shape == (B, T, HEAD_SIZE)
    max_err = float(jnp.max(jnp.abs(out - ref)))
    assert jnp.allclose(out, ref, atol=1e-3, rtol=1e-3), max_err
    print("KERNEL_OK")
</pallas_src>

<mosaic_0001>
module attributes {stable_mosaic.version = 11 : i64} {
  func.func @head_kernel(%arg0: memref<16x32xf32, #tpu.memory_space<vmem>>, %arg1: memref<32x16xf32, #tpu.memory_space<vmem>>, %arg2: memref<32x16xf32, #tpu.memory_space<vmem>>, %arg3: memref<32x16xf32, #tpu.memory_space<vmem>>, %arg4: memref<2x8x16xf32, #tpu.memory_space<vmem>>) attributes {dimension_semantics = [], scalar_prefetch = 0 : i64, scratch_operands = 0 : i64, tpu.core_type = #tpu.core_type<tc>} {
    %c0 = arith.constant 0 : index
    %c0_0 = arith.constant 0 : index
    %0 = vector.load %arg0[%c0, %c0_0] : memref<16x32xf32, #tpu.memory_space<vmem>>, vector<16x32xf32>
    %c0_1 = arith.constant 0 : index
    %c0_2 = arith.constant 0 : index
    %1 = vector.load %arg1[%c0_1, %c0_2] : memref<32x16xf32, #tpu.memory_space<vmem>>, vector<32x16xf32>
    %cst = arith.constant dense<0.000000e+00> : vector<16x16xf32>
    %2 = tpu.matmul %0, %1, %cst {dimension_numbers = #tpu.dot_dimension_numbers<[1], [0], [0], [1], [0, 0, 1, 1], [], []>} : vector<16x32xf32>, vector<32x16xf32>, vector<16x16xf32> -> vector<16x16xf32>
    %c0_3 = arith.constant 0 : index
    %c0_4 = arith.constant 0 : index
    %3 = vector.load %arg2[%c0_3, %c0_4] : memref<32x16xf32, #tpu.memory_space<vmem>>, vector<32x16xf32>
    %cst_5 = arith.constant dense<0.000000e+00> : vector<16x16xf32>
    %4 = tpu.matmul %0, %3, %cst_5 {dimension_numbers = #tpu.dot_dimension_numbers<[1], [0], [0], [1], [0, 0, 1, 1], [], []>} : vector<16x32xf32>, vector<32x16xf32>, vector<16x16xf32> -> vector<16x16xf32>
    %c0_6 = arith.constant 0 : index
    %c0_7 = arith.constant 0 : index
    %5 = vector.load %arg3[%c0_6, %c0_7] : memref<32x16xf32, #tpu.memory_space<vmem>>, vector<32x16xf32>
    %cst_8 = arith.constant dense<0.000000e+00> : vector<16x16xf32>
    %6 = tpu.matmul %0, %5, %cst_8 {dimension_numbers = #tpu.dot_dimension_numbers<[1], [0], [0], [1], [0, 0, 1, 1], [], []>} : vector<16x32xf32>, vector<32x16xf32>, vector<16x16xf32> -> vector<16x16xf32>
    %7 = vector.shape_cast %2 : vector<16x16xf32> to vector<2x8x16xf32>
    %8 = vector.shape_cast %4 : vector<16x16xf32> to vector<2x8x16xf32>
    %9 = vector.shape_cast %6 : vector<16x16xf32> to vector<2x8x16xf32>
    "tpu.trace_start"() <{level = 10 : i32, message = "btd,bsd->bts"}> : () -> ()
    %cst_9 = arith.constant dense<0.000000e+00> : vector<2x8x8xf32>
    %10 = tpu.matmul %7, %8, %cst_9 {dimension_numbers = #tpu.dot_dimension_numbers<[2], [2], [1], [1], [0, 0, 0, 1, 1, 1], [0], [0]>} : vector<2x8x16xf32>, vector<2x8x16xf32>, vector<2x8x8xf32> -> vector<2x8x8xf32>
    "tpu.trace_stop"() : () -> ()
    %11 = tpu.iota {dimensions = array<i32: 0>} : vector<8x8xi32>
    %12 = tpu.iota {dimensions = array<i32: 1>} : vector<8x8xi32>
    %13 = arith.cmpi sge, %11, %12 : vector<8x8xi32>
    %14 = vector.shape_cast %13 : vector<8x8xi1> to vector<1x8x8xi1>
    %cst_10 = arith.constant -1.000000e+30 : f32
    %15 = vector.shape_cast %14 : vector<1x8x8xi1> to vector<1x8x8xi1>
    %16 = vector.broadcast %15 : vector<1x8x8xi1> to vector<2x8x8xi1>
    %17 = vector.broadcast %cst_10 : f32 to vector<2x8x8xf32>
    %18 = arith.select %16, %10, %17 : vector<2x8x8xi1>, vector<2x8x8xf32>
    %cst_11 = arith.constant dense<0xFF800000> : vector<2x8xf32>
    %19 = vector.multi_reduction <maximumf>, %18, %cst_11 [2] : vector<2x8x8xf32> to vector<2x8xf32>
    %20 = vector.shape_cast %19 : vector<2x8xf32> to vector<2x8x1xf32>
    %21 = vector.broadcast %20 : vector<2x8x1xf32> to vector<2x8x8xf32>
    %22 = arith.subf %18, %21 : vector<2x8x8xf32>
    %23 = math.exp %22 : vector<2x8x8xf32>
    %cst_12 = arith.constant dense<0.000000e+00> : vector<2x8xf32>
    %24 = vector.multi_reduction <add>, %23, %cst_12 [2] : vector<2x8x8xf32> to vector<2x8xf32>
    %25 = vector.shape_cast %24 : vector<2x8xf32> to vector<2x8x1xf32>
    %26 = vector.broadcast %25 : vector<2x8x1xf32> to vector<2x8x8xf32>
    %27 = arith.divf %23, %26 : vector<2x8x8xf32>
    "tpu.trace_start"() <{level = 10 : i32, message = "bts,bsd->btd"}> : () -> ()
    %cst_13 = arith.constant dense<0.000000e+00> : vector<2x8x16xf32>
    %28 = tpu.matmul %27, %9, %cst_13 {dimension_numbers = #tpu.dot_dimension_numbers<[2], [1], [1], [2], [0, 0, 0, 1, 1, 2], [0], [0]>} : vector<2x8x8xf32>, vector<2x8x16xf32>, vector<2x8x16xf32> -> vector<2x8x16xf32>
    "tpu.trace_stop"() : () -> ()
    %c0_14 = arith.constant 0 : index
    %c0_15 = arith.constant 0 : index
    %c0_16 = arith.constant 0 : index
    %29 = vector.load %arg4[%c0_14, %c0_15, %c0_16] : memref<2x8x16xf32, #tpu.memory_space<vmem>>, vector<2x8x16xf32>
    tpu.vector_store %arg4[%c0_14, %c0_15, %c0_16], %28 {strides = array<i32>} : memref<2x8x16xf32, #tpu.memory_space<vmem>>, vector<2x8x16xf32>,
    return
  }
}

</mosaic_0001>

<llo_original>
// kernel: tpu_custom_call.1
$region0: #{tpu_custom_call.1}
  #allocation0 [shape = 'u32[]', space=smem, size = 0x4, offset = 0x4, fixed_abs, tag = 'smem constant byte address 0x4 - core index']
  #allocation1 [shape = 'u32[72,128]{1,0:T(1,128)}', space=vmem, size = 0x9000, scoped, tag = 'internal scratch']
  %s0 = inlined_call_operand.vmem [shape: f32[16,32], index: 0, kind: input, shape index: {}]
  %s1 = inlined_call_operand.vmem [shape: f32[32,16], index: 1, kind: input, shape index: {}]
  %s2 = inlined_call_operand.vmem [shape: f32[32,16], index: 2, kind: input, shape index: {}]
  %s3 = inlined_call_operand.vmem [shape: f32[32,16], index: 3, kind: input, shape index: {}]
  %s4 = inlined_call_operand.hbm [shape: f32[2,8,16], index: 4, kind: output, shape index: {}]
  %s5 = sld [smem:[#allocation0]]
  $region26: #{tpu_custom_call.1} parent=0
    _
  %s7 = ssub.s32 1, %s5
  %s8 = scalar_select 0, %s7, %s5
  $region1: #{tpu_custom_call.1} parent=0
    #allocation2 [shape = 'u8[8192]{0}', space=vmem, size = 0x2000, scoped, tag = 'output window, operand 0, single buffered']
    #allocation3 [shape = 's32[1]{0}', space=sflag, size = 0x4, scoped, tag = 'scoped memory for tpu_custom_call.1']
    %9 = vsyncpa [#allocation3], 0
    // Predicated region
    $region2: #{tpu_custom_call.1} parent=1 // pred_check
      _
    $region3: #{tpu_custom_call.1} parent=1 // pred_check_branch
      %11 = sbr.rel (0) target = $region5
    $region4: #{tpu_custom_call.1} parent=1 // pred_region
      _
    $region5: #{tpu_custom_call.1} parent=1 // pred_fallthru
      _
    // Predicated region
    $region6: #{tpu_custom_call.1} parent=1 // pred_check
      _
    $region7: #{tpu_custom_call.1} parent=1 // pred_check_branch
      %13 = sbr.rel (0) target = $region9
    $region8: #{tpu_custom_call.1} parent=1 // pred_region
      _
    $region9: #{tpu_custom_call.1} parent=1 // pred_fallthru
      _
    // Predicated region
    $region10: #{tpu_custom_call.1} parent=1 // pred_check
      _
    $region11: #{tpu_custom_call.1} parent=1 // pred_check_branch
      %15 = sbr.rel (0) target = $region13
    $region12: #{tpu_custom_call.1} parent=1 // pred_region
      _
    $region13: #{tpu_custom_call.1} parent=1 // pred_fallthru
      _
    // Predicated region
    $region14: #{tpu_custom_call.1} parent=1 // pred_check
      _
    $region15: #{tpu_custom_call.1} parent=1 // pred_check_branch
      %17 = sbr.rel (0) target = $region17
    $region16: #{tpu_custom_call.1} parent=1 // pred_region
      _
    $region17: #{tpu_custom_call.1} parent=1 // pred_fallthru
      _
    %v18 = vld [vmem:[%s0] sm:$0xff]
    %v19 = vld [vmem:[%s0 + $0x8] sm:$0xff]
    %v20 = vld [vmem:[%s1] sm:$0xff]
    %v21 = vld [vmem:[%s1 + $0x8] sm:$0xff]
    %v22 = vld [vmem:[%s1 + $0x10] sm:$0xff]
    %v23 = vld [vmem:[%s1 + $0x18] sm:$0xff]
    %vm24 = vcmask 261120
    %v26 = vsel %vm24, %v18, 0
    %v29 = vsel %vm24, %v19, 0
    %31 = vmatpush.msra.mxu0 0.0
    %32 = vmatpush.msra.mxu0 0.0
    %33 = vmatpush.msra.mxu0 0.0
    %34 = vmatpush.msra.mxu0 0.0
    %35 = vmatpush.msra.mxu0 0.0
    %36 = vmatpush.msra.mxu0 0.0
    %37 = vmatpush.msra.mxu0 0.0
    %38 = vmatpush.msra.mxu0 0.0
    %39 = vmatpush.msra.mxu0 0.0
    %40 = vmatpush.msra.mxu0 0.0
    %41 = vmatpush.msra.mxu0 0.0
    %42 = vmatpush.msra.mxu0 0.0
    %43 = vmatpush.msra.mxu0 %v23
    %44 = vmatpush.msra.mxu0 %v22
    %45 = vmatpush.msra.mxu0 %v21
    %46 = vmatpush.msra.mxu0 %v20
    %47 = vmatmul.f32.gmra.mxu0 %v26
    %v48 = vpop.f32.mrf.mxu0
    %v49 = vadd.f32 0.0, %v48
    %50 = vmatmul.f32.gmra.mxu0 %v29
    %v51 = vpop.f32.mrf.mxu0
    %v52 = vadd.f32 0.0, %v51
    %53 = vdwg.mxu0
    %v54 = vld [vmem:[%s2] sm:$0xff]
    %v55 = vld [vmem:[%s2 + $0x8] sm:$0xff]
    %v56 = vld [vmem:[%s2 + $0x10] sm:$0xff]
    %v57 = vld [vmem:[%s2 + $0x18] sm:$0xff]
    %58 = vmatpush.msra.mxu0 0.0
    %59 = vmatpush.msra.mxu0 0.0
    %60 = vmatpush.msra.mxu0 0.0
    %61 = vmatpush.msra.mxu0 0.0
    %62 = vmatpush.msra.mxu0 0.0
    %63 = vmatpush.msra.mxu0 0.0
    %64 = vmatpush.msra.mxu0 0.0
    %65 = vmatpush.msra.mxu0 0.0
    %66 = vmatpush.msra.mxu0 0.0
    %67 = vmatpush.msra.mxu0 0.0
    %68 = vmatpush.msra.mxu0 0.0
    %69 = vmatpush.msra.mxu0 0.0
    %70 = vmatpush.msra.mxu0 %v57
    %71 = vmatpush.msra.mxu0 %v56
    %72 = vmatpush.msra.mxu0 %v55
    %73 = vmatpush.msra.mxu0 %v54
    %74 = vmatmul.f32.gmra.mxu0 %v26
    %v75 = vpop.f32.mrf.mxu0
    %v76 = vadd.f32 0.0, %v75
    %77 = vmatmul.f32.gmra.mxu0 %v29
    %v78 = vpop.f32.mrf.mxu0
    %v79 = vadd.f32 0.0, %v78
    %80 = vdwg.mxu0
    %v81 = vld [vmem:[%s3] sm:$0xff]
    %v82 = vld [vmem:[%s3 + $0x8] sm:$0xff]
    %v83 = vld [vmem:[%s3 + $0x10] sm:$0xff]
    %v84 = vld [vmem:[%s3 + $0x18] sm:$0xff]
    %85 = vmatpush.msra.mxu0 0.0
    %86 = vmatpush.msra.mxu0 0.0
    %87 = vmatpush.msra.mxu0 0.0
    %88 = vmatpush.msra.mxu0 0.0
    %89 = vmatpush.msra.mxu0 0.0
    %90 = vmatpush.msra.mxu0 0.0
    %91 = vmatpush.msra.mxu0 0.0
    %92 = vmatpush.msra.mxu0 0.0
    %93 = vmatpush.msra.mxu0 0.0
    %94 = vmatpush.msra.mxu0 0.0
    %95 = vmatpush.msra.mxu0 0.0
    %96 = vmatpush.msra.mxu0 0.0
    %97 = vmatpush.msra.mxu0 %v84
    %98 = vmatpush.msra.mxu0 %v83
    %99 = vmatpush.msra.mxu0 %v82
    %100 = vmatpush.msra.mxu0 %v81
    %101 = vmatmul.f32.gmra.mxu0 %v26
    %v102 = vpop.f32.mrf.mxu0
    %v103 = vadd.f32 0.0, %v102
    %104 = vmatmul.f32.gmra.mxu0 %v29
    %v105 = vpop.f32.mrf.mxu0
    %v106 = vadd.f32 0.0, %v105
    %107 = vdwg.mxu0
    %vm108 = vcmask 130048
    %v110 = vsel %vm108, %v49, 0
    %v113 = vsel %vm108, %v76, 0
    %115 = vmatpush.xpose.msra.mxu0 0.0
    %116 = vmatpush.xpose.msra.mxu0 0.0
    %117 = vmatpush.xpose.msra.mxu0 0.0
    %118 = vmatpush.xpose.msra.mxu0 0.0
    %119 = vmatpush.xpose.msra.mxu0 0.0
    %120 = vmatpush.xpose.msra.mxu0 0.0
    %121 = vmatpush.xpose.msra.mxu0 0.0
    %122 = vmatpush.xpose.msra.mxu0 0.0
    %123 = vmatpush.xpose.msra.mxu0 0.0
    %124 = vmatpush.xpose.msra.mxu0 0.0
    %125 = vmatpush.xpose.msra.mxu0 0.0
    %126 = vmatpush.xpose.msra.mxu0 0.0
    %127 = vmatpush.xpose.msra.mxu0 0.0
    %128 = vmatpush.xpose.msra.mxu0 0.0
    %129 = vmatpush.xpose.msra.mxu0 0.0
    %130 = vmatpush.xpose.msra.mxu0 %v113
    %131 = vmatmul.f32.gmra.mxu0 %v110
    %v132 = vpop.f32.mrf.mxu0
    %v133 = vadd.f32 0.0, %v132
    %134 = vdwg.mxu0
    %v136 = vsel %vm108, %v52, 0
    %v139 = vsel %vm108, %v79, 0
    %141 = vmatpush.xpose.msra.mxu0 0.0
    %142 = vmatpush.xpose.msra.mxu0 0.0
    %143 = vmatpush.xpose.msra.mxu0 0.0
    %144 = vmatpush.xpose.msra.mxu0 0.0
    %145 = vmatpush.xpose.msra.mxu0 0.0
    %146 = vmatpush.xpose.msra.mxu0 0.0
    %147 = vmatpush.xpose.msra.mxu0 0.0
    %148 = vmatpush.xpose.msra.mxu0 0.0
    %149 = vmatpush.xpose.msra.mxu0 0.0
    %150 = vmatpush.xpose.msra.mxu0 0.0
    %151 = vmatpush.xpose.msra.mxu0 0.0
    %152 = vmatpush.xpose.msra.mxu0 0.0
    %153 = vmatpush.xpose.msra.mxu0 0.0
    %154 = vmatpush.xpose.msra.mxu0 0.0
    %155 = vmatpush.xpose.msra.mxu0 0.0
    %156 = vmatpush.xpose.msra.mxu0 %v139
    %157 = vmatmul.f32.gmra.mxu0 %v136
    %v158 = vpop.f32.mrf.mxu0
    %v159 = vadd.f32 0.0, %v158
    %160 = vdwg.mxu0
    %v161 = vlaneseq
    %v162 = vshrl.u32 %v161, 7
    %v163 = vlaneseq
    %v164 = vand.u32 %v163, 127
    %vm165 = vcmp.ge.s32.totalorder %v162, %v164
    %v166 = vsel %vm165, 1, 0
    %vm167 = vcmp.eq.s32.totalorder %v166, 1
    %v168 = vsel %vm167, %v133, -1e+30
    %v169 = vsel %vm167, %v159, -1e+30
    %vm170 = vcmask 64512
    %v171 = vsel %vm170, %v168, -inf
    %172 = vmax.xlane.f32.xlu0 %v171
    %v173 = vpop.xlane.xlu0 %172
    %v174 = vsel %vm170, %v169, -inf
    %175 = vmax.xlane.f32.xlu0 %v174
    %v176 = vpop.xlane.xlu0 %175
    %v177 = vsub.f32 %v168, %v173
    %v178 = vsub.f32 %v169, %v176
    %v179 = vmul.f32 %v177, 1.442695
    %v180 = vpow.pop %v179
    %v181 = vmul.f32 %v178, 1.442695
    %v182 = vpow.pop %v181
    %v183 = vsel %vm170, %v180, 0.0
    %184 = vadd.xlane.f32.xlu0 %v183
    %v185 = vpop.xlane.xlu0 %184
    %v186 = vsel %vm170, %v182, 0.0
    %187 = vadd.xlane.f32.xlu0 %v186
    %v188 = vpop.xlane.xlu0 %187
    %v189 = vrcp.pop %v185
    %v190 = vmul.f32 %v185, %v189
    %v191 = vsub.f32 1.0, %v190
    %v192 = vmul.f32 %v189, %v191
    %v193 = vadd.f32 %v189, %v192
    %vm194 = vweird.f32 %v185
    %vm195 = vweird.f32 %v189
    %vm196 = vmor %vm194, %vm195
    %v197 = vsel %vm196, %v189, %v193
    %v198 = vand.u32 2147483647, %v185
    %vm199 = vcmp.eq.f32.partialorder %v198, 8.507059e+37
    %v200 = vand.u32 %v185, 2147483648
    %v201 = vor.u32 1.1754944e-38, %v200
    %v202 = vsel %vm199, %v201, %v197
    %v203 = vmul.f32 %v180, %v202
    %v204 = vrcp.pop %v188
    %v205 = vmul.f32 %v188, %v204
    %v206 = vsub.f32 1.0, %v205
    %v207 = vmul.f32 %v204, %v206
    %v208 = vadd.f32 %v204, %v207
    %vm209 = vweird.f32 %v188
    %vm210 = vweird.f32 %v204
    %vm211 = vmor %vm209, %vm210
    %v212 = vsel %vm211, %v204, %v208
    %v213 = vand.u32 2147483647, %v188
    %vm214 = vcmp.eq.f32.partialorder %v213, 8.507059e+37
    %v215 = vand.u32 %v188, 2147483648
    %v216 = vor.u32 1.1754944e-38, %v215
    %v217 = vsel %vm214, %v216, %v212
    %v218 = vmul.f32 %v182, %v217
    %v220 = vsel %vm170, %v203, 0
    %222 = vmatpush.msra.mxu0 0.0
    %223 = vmatpush.msra.mxu0 0.0
    %224 = vmatpush.msra.mxu0 0.0
    %225 = vmatpush.msra.mxu0 0.0
    %226 = vmatpush.msra.mxu0 0.0
    %227 = vmatpush.msra.mxu0 0.0
    %228 = vmatpush.msra.mxu0 0.0
    %229 = vmatpush.msra.mxu0 0.0
    %230 = vmatpush.msra.mxu0 0.0
    %231 = vmatpush.msra.mxu0 0.0
    %232 = vmatpush.msra.mxu0 0.0
    %233 = vmatpush.msra.mxu0 0.0
    %234 = vmatpush.msra.mxu0 0.0
    %235 = vmatpush.msra.mxu0 0.0
    %236 = vmatpush.msra.mxu0 0.0
    %237 = vmatpush.msra.mxu0 %v103
    %238 = vmatmul.f32.gmra.mxu0 %v220
    %v239 = vpop.f32.mrf.mxu0
    %v240 = vadd.f32 0.0, %v239
    %241 = vdwg.mxu0
    %v243 = vsel %vm170, %v218, 0
    %245 = vmatpush.msra.mxu0 0.0
    %246 = vmatpush.msra.mxu0 0.0
    %247 = vmatpush.msra.mxu0 0.0
    %248 = vmatpush.msra.mxu0 0.0
    %249 = vmatpush.msra.mxu0 0.0
    %250 = vmatpush.msra.mxu0 0.0
    %251 = vmatpush.msra.mxu0 0.0
    %252 = vmatpush.msra.mxu0 0.0
    %253 = vmatpush.msra.mxu0 0.0
    %254 = vmatpush.msra.mxu0 0.0
    %255 = vmatpush.msra.mxu0 0.0
    %256 = vmatpush.msra.mxu0 0.0
    %257 = vmatpush.msra.mxu0 0.0
    %258 = vmatpush.msra.mxu0 0.0
    %259 = vmatpush.msra.mxu0 0.0
    %260 = vmatpush.msra.mxu0 %v106
    %261 = vmatmul.f32.gmra.mxu0 %v243
    %v262 = vpop.f32.mrf.mxu0
    %v263 = vadd.f32 0.0, %v262
    %264 = vdwg.mxu0
    %265 = vst.msk [vmem:[#allocation2] sm:$0xff] %vm108, %v240
    %266 = vst.msk [vmem:[#allocation2 + $0x8] sm:$0xff] %vm108, %v263
    // Predicated region
    $region18: #{tpu_custom_call.1} parent=1 // pred_check
      _
    $region19: #{tpu_custom_call.1} parent=1 // pred_check_branch
      %268 = sbr.rel (0) target = $region21
    $region20: #{tpu_custom_call.1} parent=1 // pred_region
      %270 = vsyncadd [#allocation3], 0
      %s271 = sshll.u32 [#allocation2], 4
      %s272 = int_to_ptr.vmem [resolvable:$true] %s271
      %s273 = sshll.u32 %s4, 4
      %s274 = int_to_ptr.hbm [resolvable:$true] %s273
      %279 = dma.vmem_to_hbm [thread:$0]  %s272, 256, %s274, [#allocation3], 128, 128, 8
    $region21: #{tpu_custom_call.1} parent=1 // pred_fallthru
      _
    // Predicated region
    $region22: #{tpu_custom_call.1} parent=1 // pred_check
      _
    $region23: #{tpu_custom_call.1} parent=1 // pred_check_branch
      %281 = sbr.rel (0) target = $region25
    $region24: #{tpu_custom_call.1} parent=1 // pred_region
      %283 = dma.done [#allocation3], 256
    $region25: #{tpu_custom_call.1} parent=1 // pred_fallthru
      _
    %284 = vsyncpa [#allocation3], 1

</llo_original>
